<compile_context>
chip_gen: v5e
topology: v5e:2x2
jax: 0.10.0
libtpu: 0.0.40
codegen_flags: <defaults>
</compile_context>

<pallas_src>
import math
import numpy as np
import jax
import jax.numpy as jnp
from jax import lax
from jax.experimental import pallas as pl
from jax.experimental.pallas import tpu as pltpu


def _full_spec(shape):
    """BlockSpec covering the whole (small) array as a single VMEM block."""
    n = len(shape)
    return pl.BlockSpec(shape, lambda i, n=n: (0,) * n)


# ---------------------------------------------------------------------------
# Fused forward kernel
# ---------------------------------------------------------------------------
def _retain_fused_kernel(counts_ref, emb_ref, w_in_ref, b_in_ref,
                         whh_ref, bhn_ref, wb_ref, bb_ref, wo_ref, bo_ref,
                         out_ref, x_scr, hb_scr):
    T = counts_ref.shape[0]
    E = emb_ref.shape[1]

    # 1. Embedding lookup + per-visit sum as a single MXU matmul:
    #    ve[t] = sum_code emb[code] == counts[t, :] @ emb   (pad row of emb is 0).
    ve = jnp.dot(counts_ref[...], emb_ref[...],
                 preferred_element_type=jnp.float32)                       # (T, E)

    # 2. Input projections of BOTH GRUs / all gates in one lane-dense matmul.
    #    Column layout: [r_a | r_b | z_a | z_b | n_a | n_b] (each E wide).
    #    b_hr / b_hz are already folded into b_in (feedback: fewer ops on the
    #    serial recurrence path).
    x_scr[...] = (jnp.dot(ve, w_in_ref[...], preferred_element_type=jnp.float32)
                  + b_in_ref[...])                                         # (T, 6E)

    whh = whh_ref[...]                                                     # (2E, 6E)
    bhn = bhn_ref[...]                                                     # (1, 2E)

    # 3. Both GRU recurrences interleaved: carry h_cat = [h_alpha | h_beta].
    #    One block-diagonal matmul per step produces all r/z/n gates of both GRUs.
    def step(t, h_cat):
        x_t = x_scr[pl.ds(t, 1), :]                                        # (1, 6E)
        gh = jnp.dot(h_cat, whh, preferred_element_type=jnp.float32)       # (1, 6E)
        r = jax.nn.sigmoid(x_t[:, :2 * E] + gh[:, :2 * E])                 # (1, 2E)
        z = jax.nn.sigmoid(x_t[:, 2 * E:4 * E] + gh[:, 2 * E:4 * E])       # (1, 2E)
        n = jnp.tanh(x_t[:, 4 * E:] + r * (gh[:, 4 * E:] + bhn))           # (1, 2E)
        h_new = (1.0 - z) * n + z * h_cat                                  # (1, 2E)
        hb_scr[pl.ds(t, 1), :] = h_new[:, E:]            # beta-GRU hidden state
        return h_new

    lax.fori_loop(0, T, step, jnp.zeros((1, 2 * E), jnp.float32), unroll=True)

    # 4. Attention head + output linear.
    #    softmax(alpha_li(g), dim=-1) is over a size-1 axis => attn_g == 1.0
    #    identically, so it is elided (zero numerical change vs. the reference).
    attn_h = jnp.tanh(jnp.dot(hb_scr[...], wb_ref[...],
                              preferred_element_type=jnp.float32)
                      + bb_ref[...])                                       # (T, E)
    c = jnp.sum(attn_h * ve, axis=0, keepdims=True)                        # (1, E)
    out = jnp.dot(c, wo_ref[...], preferred_element_type=jnp.float32) + bo_ref[...]
    out_ref[...] = out.astype(out_ref.dtype)                               # (1, O)


def retain_forward(counts, prepared):
    """counts: [T, V] f32 per-visit code counts; prepared: output of prepare_params."""
    (emb, w_in, b_in, whh_both, bhn_cat, wb_t, bb, wo_t, bo) = prepared
    T, _ = counts.shape
    E = emb.shape[1]
    O = wo_t.shape[1]
    operands = (counts, emb, w_in, b_in, whh_both, bhn_cat, wb_t, bb, wo_t, bo)
    return pl.pallas_call(
        _retain_fused_kernel,
        out_shape=jax.ShapeDtypeStruct((1, O), jnp.float32),
        grid_spec=pltpu.PrefetchScalarGridSpec(
            num_scalar_prefetch=0,
            grid=(1,),
            in_specs=[_full_spec(a.shape) for a in operands],
            out_specs=_full_spec((1, O)),
            scratch_shapes=[
                pltpu.VMEM((T, 6 * E), jnp.float32),   # precomputed input projections
                pltpu.VMEM((T, E), jnp.float32),       # beta-GRU hidden states
            ],
        ),
        compiler_params=pltpu.CompilerParams(dimension_semantics=("arbitrary",)),
    )(*operands)


# ---------------------------------------------------------------------------
# One-time host-side parameter preparation (hoisted out of the forward call)
# ---------------------------------------------------------------------------
def prepare_params(params):
    (emb, wih_a, whh_a, bih_a, bhh_a,
     wih_b, whh_b, bih_b, bhh_b,
     wa, ba, wb, bb, wo, bo) = params
    E = emb.shape[1]

    def split3(w):                      # (3E, E) -> r, z, n blocks, each (E, E)
        return w[:E], w[E:2 * E], w[2 * E:]

    wir_a, wiz_a, win_a = split3(wih_a)
    wir_b, wiz_b, win_b = split3(wih_b)
    whr_a, whz_a, whn_a = split3(whh_a)
    whr_b, whz_b, whn_b = split3(whh_b)

    # Input-projection weight, column layout [r_a | r_b | z_a | z_b | n_a | n_b].
    w_in = jnp.concatenate(
        [wir_a.T, wir_b.T, wiz_a.T, wiz_b.T, win_a.T, win_b.T], axis=1)    # (E, 6E)

    # Fold b_hr / b_hz into the input bias; b_hn stays inside the step.
    b_in = jnp.concatenate([
        bih_a[:E] + bhh_a[:E],             bih_b[:E] + bhh_b[:E],
        bih_a[E:2 * E] + bhh_a[E:2 * E],   bih_b[E:2 * E] + bhh_b[E:2 * E],
        bih_a[2 * E:],                     bih_b[2 * E:],
    ]).reshape(1, 6 * E)

    # Block-diagonal hidden-to-hidden weight so that
    #   h_cat[1,2E] @ whh_both[2E,6E] == all r/z/n gates of both GRUs.
    Z = jnp.zeros((E, E), jnp.float32)
    whh_both = jnp.concatenate([
        jnp.concatenate([whr_a.T, Z, whz_a.T, Z, whn_a.T, Z], axis=1),     # h_alpha rows
        jnp.concatenate([Z, whr_b.T, Z, whz_b.T, Z, whn_b.T], axis=1),     # h_beta rows
    ], axis=0)                                                             # (2E, 6E)

    bhn_cat = jnp.concatenate([bhh_a[2 * E:], bhh_b[2 * E:]]).reshape(1, 2 * E)

    # wa / ba (alpha_li) are unused: softmax over a size-1 axis is identically 1.
    return (emb, w_in, b_in, whh_both, bhn_cat,
            wb.T, bb.reshape(1, -1), wo.T, bo.reshape(1, -1))


# ---------------------------------------------------------------------------
# Host-side preprocessing (mirrors the module's nested-list forward() prologue)
# ---------------------------------------------------------------------------
def build_counts_and_idx(patient, vocab_size):
    input_len = sum(vocab_size)
    V = input_len + 1                              # +1 padding row (zero embedding)
    T = len(patient)
    max_len = max(len(v[0]) + len(v[1]) + len(v[2]) for v in patient)
    counts = np.zeros((T, V), dtype=np.float32)
    rows = []
    for t, visit in enumerate(patient):
        r = list(visit[0])
        r += [c + vocab_size[0] for c in visit[1]]
        r += [c + vocab_size[0] + vocab_size[1] for c in visit[2]]
        for c in r:
            counts[t, c] += 1.0
        r += [input_len] * (max_len - len(r))
        rows.append(r)
    idx = jnp.asarray(np.array(rows, dtype=np.int32))
    return jnp.asarray(counts), idx


# ---------------------------------------------------------------------------
# Plain-JAX reference (follows the PyTorch module literally)
# ---------------------------------------------------------------------------
def reference_forward(idx, params):
    (emb, wih_a, whh_a, bih_a, bhh_a,
     wih_b, whh_b, bih_b, bhh_b,
     wa, ba, wb, bb, wo, bo) = params
    E = emb.shape[1]
    ve = emb[idx].sum(axis=1)

    def gru(xs, wih, whh, bih, bhh):
        def step(h, x):
            gi = x @ wih.T + bih
            gh = h @ whh.T + bhh
            ir, iz, inn = gi[:E], gi[E:2 * E], gi[2 * E:]
            hr, hz, hn = gh[:E], gh[E:2 * E], gh[2 * E:]
            r = jax.nn.sigmoid(ir + hr)
            z = jax.nn.sigmoid(iz + hz)
            n = jnp.tanh(inn + r * hn)
            h_new = (1.0 - z) * n + z * h
            return h_new, h_new

        _, hs = lax.scan(step, jnp.zeros((E,), jnp.float32), xs)
        return hs

    g = gru(ve, wih_a, whh_a, bih_a, bhh_a)
    h = gru(ve, wih_b, whh_b, bih_b, bhh_b)
    a = g @ wa.T + ba
    attn_g = jax.nn.softmax(a, axis=-1)
    attn_h = jnp.tanh(h @ wb.T + bb)
    c = jnp.sum(attn_g * attn_h * ve, axis=0, keepdims=True)
    return c @ wo.T + bo


if __name__ == "__main__":
    vocab_size = (8, 8, 16)
    emb_size = 32
    input_len = sum(vocab_size)      # 32
    output_len = vocab_size[2]       # 16

    # One patient: list of visits, each visit = (diag codes, proc codes, med codes).
    patient = [
        ([0, 2, 5], [1, 3],    [0, 4, 7]),
        ([1, 4],    [0, 2, 6], [2, 9, 11, 3]),
        ([3],       [5],       [1, 8]),
        ([2, 6, 7], [4],       [0, 5, 10, 12]),
        ([0, 1],    [2, 7],    [6, 13]),
        ([5],       [3, 6],    [14, 2, 0]),
    ]

    counts, idx = build_counts_and_idx(patient, vocab_size)     # [T,V] f32, [T,C] i32

    key = jax.random.PRNGKey(0)
    keys = jax.random.split(key, 16)
    E = emb_size
    stdv = 1.0 / math.sqrt(E)

    def unif(k, shape, s):
        return jax.random.uniform(k, shape, jnp.float32, minval=-s, maxval=s)

    emb = jax.random.normal(keys[0], (input_len + 1, E), jnp.float32)
    emb = emb.at[input_len].set(0.0)     # padding_idx row is zero

    wih_a = unif(keys[1], (3 * E, E), stdv); whh_a = unif(keys[2], (3 * E, E), stdv)
    bih_a = unif(keys[3], (3 * E,), stdv);   bhh_a = unif(keys[4], (3 * E,), stdv)
    wih_b = unif(keys[5], (3 * E, E), stdv); whh_b = unif(keys[6], (3 * E, E), stdv)
    bih_b = unif(keys[7], (3 * E,), stdv);   bhh_b = unif(keys[8], (3 * E,), stdv)

    wa = unif(keys[9], (1, E), stdv);            ba = unif(keys[10], (1,), stdv)
    wb = unif(keys[11], (E, E), stdv);           bb = unif(keys[12], (E,), stdv)
    wo = unif(keys[13], (output_len, E), stdv);  bo = unif(keys[14], (output_len,), stdv)

    params = (emb, wih_a, whh_a, bih_a, bhh_a,
              wih_b, whh_b, bih_b, bhh_b,
              wa, ba, wb, bb, wo, bo)

    prepared = prepare_params(params)            # hoisted: done once per model load

    out = retain_forward(counts, prepared)
    out = jax.block_until_ready(out)

    ref = reference_forward(idx, params)
    assert out.shape == (1, output_len)
    assert jnp.allclose(out, ref, atol=1e-3, rtol=1e-3), (
        f"mismatch vs reference, max abs diff = {jnp.max(jnp.abs(out - ref))}")

    print("KERNEL_OK")
</pallas_src>

<mosaic_0001>
module attributes {stable_mosaic.version = 11 : i64} {
  func.func @_retain_fused_kernel(%arg0: i32, %arg1: memref<6x33xf32, #tpu.memory_space<vmem>>, %arg2: memref<33x32xf32, #tpu.memory_space<vmem>>, %arg3: memref<32x192xf32, #tpu.memory_space<vmem>>, %arg4: memref<1x192xf32, #tpu.memory_space<vmem>>, %arg5: memref<64x192xf32, #tpu.memory_space<vmem>>, %arg6: memref<1x64xf32, #tpu.memory_space<vmem>>, %arg7: memref<32x32xf32, #tpu.memory_space<vmem>>, %arg8: memref<1x32xf32, #tpu.memory_space<vmem>>, %arg9: memref<32x16xf32, #tpu.memory_space<vmem>>, %arg10: memref<1x16xf32, #tpu.memory_space<vmem>>, %arg11: memref<1x16xf32, #tpu.memory_space<vmem>>, %arg12: memref<6x192xf32, #tpu.memory_space<vmem>>, %arg13: memref<6x32xf32, #tpu.memory_space<vmem>>) attributes {dimension_semantics = [#tpu.dimension_semantics<arbitrary>], iteration_bounds = array<i64: 1>, scalar_prefetch = 0 : i64, scratch_operands = 2 : i64, tpu.core_type = #tpu.core_type<tc>, window_params = [{pipeline_mode = #tpu.pipeline_mode<synchronous>, transform_indices = @transform_0, window_bounds = array<i64: 6, 33>}, {pipeline_mode = #tpu.pipeline_mode<synchronous>, transform_indices = @transform_1, window_bounds = array<i64: 33, 32>}, {pipeline_mode = #tpu.pipeline_mode<synchronous>, transform_indices = @transform_2, window_bounds = array<i64: 32, 192>}, {pipeline_mode = #tpu.pipeline_mode<synchronous>, transform_indices = @transform_3, window_bounds = array<i64: 1, 192>}, {pipeline_mode = #tpu.pipeline_mode<synchronous>, transform_indices = @transform_4, window_bounds = array<i64: 64, 192>}, {pipeline_mode = #tpu.pipeline_mode<synchronous>, transform_indices = @transform_5, window_bounds = array<i64: 1, 64>}, {pipeline_mode = #tpu.pipeline_mode<synchronous>, transform_indices = @transform_6, window_bounds = array<i64: 32, 32>}, {pipeline_mode = #tpu.pipeline_mode<synchronous>, transform_indices = @transform_7, window_bounds = array<i64: 1, 32>}, {pipeline_mode = #tpu.pipeline_mode<synchronous>, transform_indices = @transform_8, window_bounds = array<i64: 32, 16>}, {pipeline_mode = #tpu.pipeline_mode<synchronous>, transform_indices = @transform_9, window_bounds = array<i64: 1, 16>}, {pipeline_mode = #tpu.pipeline_mode<synchronous>, transform_indices = @transform_10, window_bounds = array<i64: 1, 16>}]} {
    %c0 = arith.constant 0 : index
    %c0_0 = arith.constant 0 : index
    %0 = vector.load %arg1[%c0, %c0_0] : memref<6x33xf32, #tpu.memory_space<vmem>>, vector<6x33xf32>
    %c0_1 = arith.constant 0 : index
    %c0_2 = arith.constant 0 : index
    %1 = vector.load %arg2[%c0_1, %c0_2] : memref<33x32xf32, #tpu.memory_space<vmem>>, vector<33x32xf32>
    %cst = arith.constant dense<0.000000e+00> : vector<6x32xf32>
    %2 = tpu.matmul %0, %1, %cst {dimension_numbers = #tpu.dot_dimension_numbers<[1], [0], [0], [1], [0, 0, 1, 1], [], []>} : vector<6x33xf32>, vector<33x32xf32>, vector<6x32xf32> -> vector<6x32xf32>
    %c0_3 = arith.constant 0 : index
    %c0_4 = arith.constant 0 : index
    %3 = vector.load %arg3[%c0_3, %c0_4] : memref<32x192xf32, #tpu.memory_space<vmem>>, vector<32x192xf32>
    %cst_5 = arith.constant dense<0.000000e+00> : vector<6x192xf32>
    %4 = tpu.matmul %2, %3, %cst_5 {dimension_numbers = #tpu.dot_dimension_numbers<[1], [0], [0], [1], [0, 0, 1, 1], [], []>} : vector<6x32xf32>, vector<32x192xf32>, vector<6x192xf32> -> vector<6x192xf32>
    %c0_6 = arith.constant 0 : index
    %c0_7 = arith.constant 0 : index
    %5 = vector.load %arg4[%c0_6, %c0_7] : memref<1x192xf32, #tpu.memory_space<vmem>>, vector<1x192xf32>
    %6 = vector.broadcast %5 : vector<1x192xf32> to vector<6x192xf32>
    %7 = arith.addf %4, %6 : vector<6x192xf32>
    %c0_8 = arith.constant 0 : index
    %c0_9 = arith.constant 0 : index
    %8 = vector.load %arg12[%c0_8, %c0_9] : memref<6x192xf32, #tpu.memory_space<vmem>>, vector<6x192xf32>
    tpu.vector_store %arg12[%c0_8, %c0_9], %7 {strides = array<i32>} : memref<6x192xf32, #tpu.memory_space<vmem>>, vector<6x192xf32>,
    %c0_10 = arith.constant 0 : index
    %c0_11 = arith.constant 0 : index
    %9 = vector.load %arg5[%c0_10, %c0_11] : memref<64x192xf32, #tpu.memory_space<vmem>>, vector<64x192xf32>
    %c0_12 = arith.constant 0 : index
    %c0_13 = arith.constant 0 : index
    %10 = vector.load %arg6[%c0_12, %c0_13] : memref<1x64xf32, #tpu.memory_space<vmem>>, vector<1x64xf32>
    %cst_14 = arith.constant 0.000000e+00 : f32
    %11 = vector.broadcast %cst_14 : f32 to vector<1x64xf32>
    %c0_i32 = arith.constant 0 : i32
    %12 = arith.index_cast %c0_i32 : i32 to index
    %c0_15 = arith.constant 0 : index
    %13 = vector.load %arg12[%12, %c0_15] : memref<6x192xf32, #tpu.memory_space<vmem>>, vector<1x192xf32>
    %cst_16 = arith.constant dense<0.000000e+00> : vector<1x192xf32>
    %14 = tpu.matmul %11, %9, %cst_16 {dimension_numbers = #tpu.dot_dimension_numbers<[1], [0], [0], [1], [0, 0, 1, 1], [], []>} : vector<1x64xf32>, vector<64x192xf32>, vector<1x192xf32> -> vector<1x192xf32>
    %15 = vector.extract_strided_slice %13 {offsets = [0, 0], sizes = [1, 64], strides = [1, 1]} : vector<1x192xf32> to vector<1x64xf32>
    %16 = vector.extract_strided_slice %14 {offsets = [0, 0], sizes = [1, 64], strides = [1, 1]} : vector<1x192xf32> to vector<1x64xf32>
    %17 = arith.addf %15, %16 : vector<1x64xf32>
    %18 = arith.negf %17 : vector<1x64xf32>
    %19 = math.exp %18 : vector<1x64xf32>
    %cst_17 = arith.constant 1.000000e+00 : f32
    %20 = vector.broadcast %cst_17 : f32 to vector<1x64xf32>
    %21 = arith.addf %20, %19 : vector<1x64xf32>
    %22 = arith.divf %20, %21 : vector<1x64xf32>
    %23 = vector.extract_strided_slice %13 {offsets = [0, 64], sizes = [1, 64], strides = [1, 1]} : vector<1x192xf32> to vector<1x64xf32>
    %24 = vector.extract_strided_slice %14 {offsets = [0, 64], sizes = [1, 64], strides = [1, 1]} : vector<1x192xf32> to vector<1x64xf32>
    %25 = arith.addf %23, %24 : vector<1x64xf32>
    %26 = arith.negf %25 : vector<1x64xf32>
    %27 = math.exp %26 : vector<1x64xf32>
    %cst_18 = arith.constant 1.000000e+00 : f32
    %28 = vector.broadcast %cst_18 : f32 to vector<1x64xf32>
    %29 = arith.addf %28, %27 : vector<1x64xf32>
    %30 = arith.divf %28, %29 : vector<1x64xf32>
    %31 = vector.extract_strided_slice %13 {offsets = [0, 128], sizes = [1, 64], strides = [1, 1]} : vector<1x192xf32> to vector<1x64xf32>
    %32 = vector.extract_strided_slice %14 {offsets = [0, 128], sizes = [1, 64], strides = [1, 1]} : vector<1x192xf32> to vector<1x64xf32>
    %33 = arith.addf %32, %10 : vector<1x64xf32>
    %34 = arith.mulf %22, %33 : vector<1x64xf32>
    %35 = arith.addf %31, %34 : vector<1x64xf32>
    %36 = math.tanh %35 : vector<1x64xf32>
    %cst_19 = arith.constant 1.000000e+00 : f32
    %37 = vector.broadcast %cst_19 : f32 to vector<1x64xf32>
    %38 = arith.subf %37, %30 : vector<1x64xf32>
    %39 = arith.mulf %38, %36 : vector<1x64xf32>
    %40 = arith.mulf %30, %11 : vector<1x64xf32>
    %41 = arith.addf %39, %40 : vector<1x64xf32>
    %42 = vector.extract_strided_slice %41 {offsets = [0, 32], sizes = [1, 32], strides = [1, 1]} : vector<1x64xf32> to vector<1x32xf32>
    %43 = arith.index_cast %c0_i32 : i32 to index
    %c0_20 = arith.constant 0 : index
    %44 = vector.load %arg13[%43, %c0_20] : memref<6x32xf32, #tpu.memory_space<vmem>>, vector<1x32xf32>
    tpu.vector_store %arg13[%43, %c0_20], %42 {strides = array<i32>} : memref<6x32xf32, #tpu.memory_space<vmem>>, vector<1x32xf32>,
    %c1_i32 = arith.constant 1 : i32
    %45 = arith.index_cast %c1_i32 : i32 to index
    %c0_21 = arith.constant 0 : index
    %46 = vector.load %arg12[%45, %c0_21] : memref<6x192xf32, #tpu.memory_space<vmem>>, vector<1x192xf32>
    %cst_22 = arith.constant dense<0.000000e+00> : vector<1x192xf32>
    %47 = tpu.matmul %41, %9, %cst_22 {dimension_numbers = #tpu.dot_dimension_numbers<[1], [0], [0], [1], [0, 0, 1, 1], [], []>} : vector<1x64xf32>, vector<64x192xf32>, vector<1x192xf32> -> vector<1x192xf32>
    %48 = vector.extract_strided_slice %46 {offsets = [0, 0], sizes = [1, 64], strides = [1, 1]} : vector<1x192xf32> to vector<1x64xf32>
    %49 = vector.extract_strided_slice %47 {offsets = [0, 0], sizes = [1, 64], strides = [1, 1]} : vector<1x192xf32> to vector<1x64xf32>
    %50 = arith.addf %48, %49 : vector<1x64xf32>
    %51 = arith.negf %50 : vector<1x64xf32>
    %52 = math.exp %51 : vector<1x64xf32>
    %cst_23 = arith.constant 1.000000e+00 : f32
    %53 = vector.broadcast %cst_23 : f32 to vector<1x64xf32>
    %54 = arith.addf %53, %52 : vector<1x64xf32>
    %55 = arith.divf %53, %54 : vector<1x64xf32>
    %56 = vector.extract_strided_slice %46 {offsets = [0, 64], sizes = [1, 64], strides = [1, 1]} : vector<1x192xf32> to vector<1x64xf32>
    %57 = vector.extract_strided_slice %47 {offsets = [0, 64], sizes = [1, 64], strides = [1, 1]} : vector<1x192xf32> to vector<1x64xf32>
    %58 = arith.addf %56, %57 : vector<1x64xf32>
    %59 = arith.negf %58 : vector<1x64xf32>
    %60 = math.exp %59 : vector<1x64xf32>
    %cst_24 = arith.constant 1.000000e+00 : f32
    %61 = vector.broadcast %cst_24 : f32 to vector<1x64xf32>
    %62 = arith.addf %61, %60 : vector<1x64xf32>
    %63 = arith.divf %61, %62 : vector<1x64xf32>
    %64 = vector.extract_strided_slice %46 {offsets = [0, 128], sizes = [1, 64], strides = [1, 1]} : vector<1x192xf32> to vector<1x64xf32>
    %65 = vector.extract_strided_slice %47 {offsets = [0, 128], sizes = [1, 64], strides = [1, 1]} : vector<1x192xf32> to vector<1x64xf32>
    %66 = arith.addf %65, %10 : vector<1x64xf32>
    %67 = arith.mulf %55, %66 : vector<1x64xf32>
    %68 = arith.addf %64, %67 : vector<1x64xf32>
    %69 = math.tanh %68 : vector<1x64xf32>
    %cst_25 = arith.constant 1.000000e+00 : f32
    %70 = vector.broadcast %cst_25 : f32 to vector<1x64xf32>
    %71 = arith.subf %70, %63 : vector<1x64xf32>
    %72 = arith.mulf %71, %69 : vector<1x64xf32>
    %73 = arith.mulf %63, %41 : vector<1x64xf32>
    %74 = arith.addf %72, %73 : vector<1x64xf32>
    %75 = vector.extract_strided_slice %74 {offsets = [0, 32], sizes = [1, 32], strides = [1, 1]} : vector<1x64xf32> to vector<1x32xf32>
    %76 = arith.index_cast %c1_i32 : i32 to index
    %c0_26 = arith.constant 0 : index
    %77 = vector.load %arg13[%76, %c0_26] : memref<6x32xf32, #tpu.memory_space<vmem>>, vector<1x32xf32>
    tpu.vector_store %arg13[%76, %c0_26], %75 {strides = array<i32>} : memref<6x32xf32, #tpu.memory_space<vmem>>, vector<1x32xf32>,
    %c2_i32 = arith.constant 2 : i32
    %78 = arith.index_cast %c2_i32 : i32 to index
    %c0_27 = arith.constant 0 : index
    %79 = vector.load %arg12[%78, %c0_27] : memref<6x192xf32, #tpu.memory_space<vmem>>, vector<1x192xf32>
    %cst_28 = arith.constant dense<0.000000e+00> : vector<1x192xf32>
    %80 = tpu.matmul %74, %9, %cst_28 {dimension_numbers = #tpu.dot_dimension_numbers<[1], [0], [0], [1], [0, 0, 1, 1], [], []>} : vector<1x64xf32>, vector<64x192xf32>, vector<1x192xf32> -> vector<1x192xf32>
    %81 = vector.extract_strided_slice %79 {offsets = [0, 0], sizes = [1, 64], strides = [1, 1]} : vector<1x192xf32> to vector<1x64xf32>
    %82 = vector.extract_strided_slice %80 {offsets = [0, 0], sizes = [1, 64], strides = [1, 1]} : vector<1x192xf32> to vector<1x64xf32>
    %83 = arith.addf %81, %82 : vector<1x64xf32>
    %84 = arith.negf %83 : vector<1x64xf32>
    %85 = math.exp %84 : vector<1x64xf32>
    %cst_29 = arith.constant 1.000000e+00 : f32
    %86 = vector.broadcast %cst_29 : f32 to vector<1x64xf32>
    %87 = arith.addf %86, %85 : vector<1x64xf32>
    %88 = arith.divf %86, %87 : vector<1x64xf32>
    %89 = vector.extract_strided_slice %79 {offsets = [0, 64], sizes = [1, 64], strides = [1, 1]} : vector<1x192xf32> to vector<1x64xf32>
    %90 = vector.extract_strided_slice %80 {offsets = [0, 64], sizes = [1, 64], strides = [1, 1]} : vector<1x192xf32> to vector<1x64xf32>
    %91 = arith.addf %89, %90 : vector<1x64xf32>
    %92 = arith.negf %91 : vector<1x64xf32>
    %93 = math.exp %92 : vector<1x64xf32>
    %cst_30 = arith.constant 1.000000e+00 : f32
    %94 = vector.broadcast %cst_30 : f32 to vector<1x64xf32>
    %95 = arith.addf %94, %93 : vector<1x64xf32>
    %96 = arith.divf %94, %95 : vector<1x64xf32>
    %97 = vector.extract_strided_slice %79 {offsets = [0, 128], sizes = [1, 64], strides = [1, 1]} : vector<1x192xf32> to vector<1x64xf32>
    %98 = vector.extract_strided_slice %80 {offsets = [0, 128], sizes = [1, 64], strides = [1, 1]} : vector<1x192xf32> to vector<1x64xf32>
    %99 = arith.addf %98, %10 : vector<1x64xf32>
    %100 = arith.mulf %88, %99 : vector<1x64xf32>
    %101 = arith.addf %97, %100 : vector<1x64xf32>
    %102 = math.tanh %101 : vector<1x64xf32>
    %cst_31 = arith.constant 1.000000e+00 : f32
    %103 = vector.broadcast %cst_31 : f32 to vector<1x64xf32>
    %104 = arith.subf %103, %96 : vector<1x64xf32>
    %105 = arith.mulf %104, %102 : vector<1x64xf32>
    %106 = arith.mulf %96, %74 : vector<1x64xf32>
    %107 = arith.addf %105, %106 : vector<1x64xf32>
    %108 = vector.extract_strided_slice %107 {offsets = [0, 32], sizes = [1, 32], strides = [1, 1]} : vector<1x64xf32> to vector<1x32xf32>
    %109 = arith.index_cast %c2_i32 : i32 to index
    %c0_32 = arith.constant 0 : index
    %110 = vector.load %arg13[%109, %c0_32] : memref<6x32xf32, #tpu.memory_space<vmem>>, vector<1x32xf32>
    tpu.vector_store %arg13[%109, %c0_32], %108 {strides = array<i32>} : memref<6x32xf32, #tpu.memory_space<vmem>>, vector<1x32xf32>,
    %c3_i32 = arith.constant 3 : i32
    %111 = arith.index_cast %c3_i32 : i32 to index
    %c0_33 = arith.constant 0 : index
    %112 = vector.load %arg12[%111, %c0_33] : memref<6x192xf32, #tpu.memory_space<vmem>>, vector<1x192xf32>
    %cst_34 = arith.constant dense<0.000000e+00> : vector<1x192xf32>
    %113 = tpu.matmul %107, %9, %cst_34 {dimension_numbers = #tpu.dot_dimension_numbers<[1], [0], [0], [1], [0, 0, 1, 1], [], []>} : vector<1x64xf32>, vector<64x192xf32>, vector<1x192xf32> -> vector<1x192xf32>
    %114 = vector.extract_strided_slice %112 {offsets = [0, 0], sizes = [1, 64], strides = [1, 1]} : vector<1x192xf32> to vector<1x64xf32>
    %115 = vector.extract_strided_slice %113 {offsets = [0, 0], sizes = [1, 64], strides = [1, 1]} : vector<1x192xf32> to vector<1x64xf32>
    %116 = arith.addf %114, %115 : vector<1x64xf32>
    %117 = arith.negf %116 : vector<1x64xf32>
    %118 = math.exp %117 : vector<1x64xf32>
    %cst_35 = arith.constant 1.000000e+00 : f32
    %119 = vector.broadcast %cst_35 : f32 to vector<1x64xf32>
    %120 = arith.addf %119, %118 : vector<1x64xf32>
    %121 = arith.divf %119, %120 : vector<1x64xf32>
    %122 = vector.extract_strided_slice %112 {offsets = [0, 64], sizes = [1, 64], strides = [1, 1]} : vector<1x192xf32> to vector<1x64xf32>
    %123 = vector.extract_strided_slice %113 {offsets = [0, 64], sizes = [1, 64], strides = [1, 1]} : vector<1x192xf32> to vector<1x64xf32>
    %124 = arith.addf %122, %123 : vector<1x64xf32>
    %125 = arith.negf %124 : vector<1x64xf32>
    %126 = math.exp %125 : vector<1x64xf32>
    %cst_36 = arith.constant 1.000000e+00 : f32
    %127 = vector.broadcast %cst_36 : f32 to vector<1x64xf32>
    %128 = arith.addf %127, %126 : vector<1x64xf32>
    %129 = arith.divf %127, %128 : vector<1x64xf32>
    %130 = vector.extract_strided_slice %112 {offsets = [0, 128], sizes = [1, 64], strides = [1, 1]} : vector<1x192xf32> to vector<1x64xf32>
    %131 = vector.extract_strided_slice %113 {offsets = [0, 128], sizes = [1, 64], strides = [1, 1]} : vector<1x192xf32> to vector<1x64xf32>
    %132 = arith.addf %131, %10 : vector<1x64xf32>
    %133 = arith.mulf %121, %132 : vector<1x64xf32>
    %134 = arith.addf %130, %133 : vector<1x64xf32>
    %135 = math.tanh %134 : vector<1x64xf32>
    %cst_37 = arith.constant 1.000000e+00 : f32
    %136 = vector.broadcast %cst_37 : f32 to vector<1x64xf32>
    %137 = arith.subf %136, %129 : vector<1x64xf32>
    %138 = arith.mulf %137, %135 : vector<1x64xf32>
    %139 = arith.mulf %129, %107 : vector<1x64xf32>
    %140 = arith.addf %138, %139 : vector<1x64xf32>
    %141 = vector.extract_strided_slice %140 {offsets = [0, 32], sizes = [1, 32], strides = [1, 1]} : vector<1x64xf32> to vector<1x32xf32>
    %142 = arith.index_cast %c3_i32 : i32 to index
    %c0_38 = arith.constant 0 : index
    %143 = vector.load %arg13[%142, %c0_38] : memref<6x32xf32, #tpu.memory_space<vmem>>, vector<1x32xf32>
    tpu.vector_store %arg13[%142, %c0_38], %141 {strides = array<i32>} : memref<6x32xf32, #tpu.memory_space<vmem>>, vector<1x32xf32>,
    %c4_i32 = arith.constant 4 : i32
    %144 = arith.index_cast %c4_i32 : i32 to index
    %c0_39 = arith.constant 0 : index
    %145 = vector.load %arg12[%144, %c0_39] : memref<6x192xf32, #tpu.memory_space<vmem>>, vector<1x192xf32>
    %cst_40 = arith.constant dense<0.000000e+00> : vector<1x192xf32>
    %146 = tpu.matmul %140, %9, %cst_40 {dimension_numbers = #tpu.dot_dimension_numbers<[1], [0], [0], [1], [0, 0, 1, 1], [], []>} : vector<1x64xf32>, vector<64x192xf32>, vector<1x192xf32> -> vector<1x192xf32>
    %147 = vector.extract_strided_slice %145 {offsets = [0, 0], sizes = [1, 64], strides = [1, 1]} : vector<1x192xf32> to vector<1x64xf32>
    %148 = vector.extract_strided_slice %146 {offsets = [0, 0], sizes = [1, 64], strides = [1, 1]} : vector<1x192xf32> to vector<1x64xf32>
    %149 = arith.addf %147, %148 : vector<1x64xf32>
    %150 = arith.negf %149 : vector<1x64xf32>
    %151 = math.exp %150 : vector<1x64xf32>
    %cst_41 = arith.constant 1.000000e+00 : f32
    %152 = vector.broadcast %cst_41 : f32 to vector<1x64xf32>
    %153 = arith.addf %152, %151 : vector<1x64xf32>
    %154 = arith.divf %152, %153 : vector<1x64xf32>
    %155 = vector.extract_strided_slice %145 {offsets = [0, 64], sizes = [1, 64], strides = [1, 1]} : vector<1x192xf32> to vector<1x64xf32>
    %156 = vector.extract_strided_slice %146 {offsets = [0, 64], sizes = [1, 64], strides = [1, 1]} : vector<1x192xf32> to vector<1x64xf32>
    %157 = arith.addf %155, %156 : vector<1x64xf32>
    %158 = arith.negf %157 : vector<1x64xf32>
    %159 = math.exp %158 : vector<1x64xf32>
    %cst_42 = arith.constant 1.000000e+00 : f32
    %160 = vector.broadcast %cst_42 : f32 to vector<1x64xf32>
    %161 = arith.addf %160, %159 : vector<1x64xf32>
    %162 = arith.divf %160, %161 : vector<1x64xf32>
    %163 = vector.extract_strided_slice %145 {offsets = [0, 128], sizes = [1, 64], strides = [1, 1]} : vector<1x192xf32> to vector<1x64xf32>
    %164 = vector.extract_strided_slice %146 {offsets = [0, 128], sizes = [1, 64], strides = [1, 1]} : vector<1x192xf32> to vector<1x64xf32>
    %165 = arith.addf %164, %10 : vector<1x64xf32>
    %166 = arith.mulf %154, %165 : vector<1x64xf32>
    %167 = arith.addf %163, %166 : vector<1x64xf32>
    %168 = math.tanh %167 : vector<1x64xf32>
    %cst_43 = arith.constant 1.000000e+00 : f32
    %169 = vector.broadcast %cst_43 : f32 to vector<1x64xf32>
    %170 = arith.subf %169, %162 : vector<1x64xf32>
    %171 = arith.mulf %170, %168 : vector<1x64xf32>
    %172 = arith.mulf %162, %140 : vector<1x64xf32>
    %173 = arith.addf %171, %172 : vector<1x64xf32>
    %174 = vector.extract_strided_slice %173 {offsets = [0, 32], sizes = [1, 32], strides = [1, 1]} : vector<1x64xf32> to vector<1x32xf32>
    %175 = arith.index_cast %c4_i32 : i32 to index
    %c0_44 = arith.constant 0 : index
    %176 = vector.load %arg13[%175, %c0_44] : memref<6x32xf32, #tpu.memory_space<vmem>>, vector<1x32xf32>
    tpu.vector_store %arg13[%175, %c0_44], %174 {strides = array<i32>} : memref<6x32xf32, #tpu.memory_space<vmem>>, vector<1x32xf32>,
    %c5_i32 = arith.constant 5 : i32
    %177 = arith.index_cast %c5_i32 : i32 to index
    %c0_45 = arith.constant 0 : index
    %178 = vector.load %arg12[%177, %c0_45] : memref<6x192xf32, #tpu.memory_space<vmem>>, vector<1x192xf32>
    %cst_46 = arith.constant dense<0.000000e+00> : vector<1x192xf32>
    %179 = tpu.matmul %173, %9, %cst_46 {dimension_numbers = #tpu.dot_dimension_numbers<[1], [0], [0], [1], [0, 0, 1, 1], [], []>} : vector<1x64xf32>, vector<64x192xf32>, vector<1x192xf32> -> vector<1x192xf32>
    %180 = vector.extract_strided_slice %178 {offsets = [0, 0], sizes = [1, 64], strides = [1, 1]} : vector<1x192xf32> to vector<1x64xf32>
    %181 = vector.extract_strided_slice %179 {offsets = [0, 0], sizes = [1, 64], strides = [1, 1]} : vector<1x192xf32> to vector<1x64xf32>
    %182 = arith.addf %180, %181 : vector<1x64xf32>
    %183 = arith.negf %182 : vector<1x64xf32>
    %184 = math.exp %183 : vector<1x64xf32>
    %cst_47 = arith.constant 1.000000e+00 : f32
    %185 = vector.broadcast %cst_47 : f32 to vector<1x64xf32>
    %186 = arith.addf %185, %184 : vector<1x64xf32>
    %187 = arith.divf %185, %186 : vector<1x64xf32>
    %188 = vector.extract_strided_slice %178 {offsets = [0, 64], sizes = [1, 64], strides = [1, 1]} : vector<1x192xf32> to vector<1x64xf32>
    %189 = vector.extract_strided_slice %179 {offsets = [0, 64], sizes = [1, 64], strides = [1, 1]} : vector<1x192xf32> to vector<1x64xf32>
    %190 = arith.addf %188, %189 : vector<1x64xf32>
    %191 = arith.negf %190 : vector<1x64xf32>
    %192 = math.exp %191 : vector<1x64xf32>
    %cst_48 = arith.constant 1.000000e+00 : f32
    %193 = vector.broadcast %cst_48 : f32 to vector<1x64xf32>
    %194 = arith.addf %193, %192 : vector<1x64xf32>
    %195 = arith.divf %193, %194 : vector<1x64xf32>
    %196 = vector.extract_strided_slice %178 {offsets = [0, 128], sizes = [1, 64], strides = [1, 1]} : vector<1x192xf32> to vector<1x64xf32>
    %197 = vector.extract_strided_slice %179 {offsets = [0, 128], sizes = [1, 64], strides = [1, 1]} : vector<1x192xf32> to vector<1x64xf32>
    %198 = arith.addf %197, %10 : vector<1x64xf32>
    %199 = arith.mulf %187, %198 : vector<1x64xf32>
    %200 = arith.addf %196, %199 : vector<1x64xf32>
    %201 = math.tanh %200 : vector<1x64xf32>
    %cst_49 = arith.constant 1.000000e+00 : f32
    %202 = vector.broadcast %cst_49 : f32 to vector<1x64xf32>
    %203 = arith.subf %202, %195 : vector<1x64xf32>
    %204 = arith.mulf %203, %201 : vector<1x64xf32>
    %205 = arith.mulf %195, %173 : vector<1x64xf32>
    %206 = arith.addf %204, %205 : vector<1x64xf32>
    %207 = vector.extract_strided_slice %206 {offsets = [0, 32], sizes = [1, 32], strides = [1, 1]} : vector<1x64xf32> to vector<1x32xf32>
    %208 = arith.index_cast %c5_i32 : i32 to index
    %c0_50 = arith.constant 0 : index
    %209 = vector.load %arg13[%208, %c0_50] : memref<6x32xf32, #tpu.memory_space<vmem>>, vector<1x32xf32>
    tpu.vector_store %arg13[%208, %c0_50], %207 {strides = array<i32>} : memref<6x32xf32, #tpu.memory_space<vmem>>, vector<1x32xf32>,
    %c6_i32 = arith.constant 6 : i32
    %c0_51 = arith.constant 0 : index
    %c0_52 = arith.constant 0 : index
    %210 = vector.load %arg13[%c0_51, %c0_52] : memref<6x32xf32, #tpu.memory_space<vmem>>, vector<6x32xf32>
    %c0_53 = arith.constant 0 : index
    %c0_54 = arith.constant 0 : index
    %211 = vector.load %arg7[%c0_53, %c0_54] : memref<32x32xf32, #tpu.memory_space<vmem>>, vector<32x32xf32>
    %cst_55 = arith.constant dense<0.000000e+00> : vector<6x32xf32>
    %212 = tpu.matmul %210, %211, %cst_55 {dimension_numbers = #tpu.dot_dimension_numbers<[1], [0], [0], [1], [0, 0, 1, 1], [], []>} : vector<6x32xf32>, vector<32x32xf32>, vector<6x32xf32> -> vector<6x32xf32>
    %c0_56 = arith.constant 0 : index
    %c0_57 = arith.constant 0 : index
    %213 = vector.load %arg8[%c0_56, %c0_57] : memref<1x32xf32, #tpu.memory_space<vmem>>, vector<1x32xf32>
    %214 = vector.broadcast %213 : vector<1x32xf32> to vector<6x32xf32>
    %215 = arith.addf %212, %214 : vector<6x32xf32>
    %216 = math.tanh %215 : vector<6x32xf32>
    %217 = arith.mulf %216, %2 : vector<6x32xf32>
    %cst_58 = arith.constant dense<0.000000e+00> : vector<32xf32>
    %218 = vector.multi_reduction <add>, %217, %cst_58 [0] : vector<6x32xf32> to vector<32xf32>
    %219 = vector.shape_cast %218 : vector<32xf32> to vector<1x32xf32>
    %c0_59 = arith.constant 0 : index
    %c0_60 = arith.constant 0 : index
    %220 = vector.load %arg9[%c0_59, %c0_60] : memref<32x16xf32, #tpu.memory_space<vmem>>, vector<32x16xf32>
    %cst_61 = arith.constant dense<0.000000e+00> : vector<1x16xf32>
    %221 = tpu.matmul %219, %220, %cst_61 {dimension_numbers = #tpu.dot_dimension_numbers<[1], [0], [0], [1], [0, 0, 1, 1], [], []>} : vector<1x32xf32>, vector<32x16xf32>, vector<1x16xf32> -> vector<1x16xf32>
    %c0_62 = arith.constant 0 : index
    %c0_63 = arith.constant 0 : index
    %222 = vector.load %arg10[%c0_62, %c0_63] : memref<1x16xf32, #tpu.memory_space<vmem>>, vector<1x16xf32>
    %223 = arith.addf %221, %222 : vector<1x16xf32>
    %c0_64 = arith.constant 0 : index
    %c0_65 = arith.constant 0 : index
    %224 = vector.load %arg11[%c0_64, %c0_65] : memref<1x16xf32, #tpu.memory_space<vmem>>, vector<1x16xf32>
    tpu.vector_store %arg11[%c0_64, %c0_65], %223 {strides = array<i32>} : memref<1x16xf32, #tpu.memory_space<vmem>>, vector<1x16xf32>,
    return
  }
  func.func @transform_0(%arg0: i32) -> (i32, i32) {
    %c0_i32 = arith.constant 0 : i32
    %c0_i32_0 = arith.constant 0 : i32
    %c0_i32_1 = arith.constant 0 : i32
    return %c0_i32, %c0_i32_0 : i32, i32
  }
  func.func @transform_1(%arg0: i32) -> (i32, i32) {
    %c0_i32 = arith.constant 0 : i32
    %c0_i32_0 = arith.constant 0 : i32
    %c0_i32_1 = arith.constant 0 : i32
    return %c0_i32, %c0_i32_0 : i32, i32
  }
  func.func @transform_2(%arg0: i32) -> (i32, i32) {
    %c0_i32 = arith.constant 0 : i32
    %c0_i32_0 = arith.constant 0 : i32
    %c0_i32_1 = arith.constant 0 : i32
    return %c0_i32, %c0_i32_0 : i32, i32
  }
  func.func @transform_3(%arg0: i32) -> (i32, i32) {
    %c0_i32 = arith.constant 0 : i32
    %c0_i32_0 = arith.constant 0 : i32
    %c0_i32_1 = arith.constant 0 : i32
    return %c0_i32, %c0_i32_0 : i32, i32
  }
  func.func @transform_4(%arg0: i32) -> (i32, i32) {
    %c0_i32 = arith.constant 0 : i32
    %c0_i32_0 = arith.constant 0 : i32
    %c0_i32_1 = arith.constant 0 : i32
    return %c0_i32, %c0_i32_0 : i32, i32
  }
  func.func @transform_5(%arg0: i32) -> (i32, i32) {
    %c0_i32 = arith.constant 0 : i32
    %c0_i32_0 = arith.constant 0 : i32
    %c0_i32_1 = arith.constant 0 : i32
    return %c0_i32, %c0_i32_0 : i32, i32
  }
  func.func @transform_6(%arg0: i32) -> (i32, i32) {
    %c0_i32 = arith.constant 0 : i32
    %c0_i32_0 = arith.constant 0 : i32
    %c0_i32_1 = arith.constant 0 : i32
    return %c0_i32, %c0_i32_0 : i32, i32
  }
  func.func @transform_7(%arg0: i32) -> (i32, i32) {
    %c0_i32 = arith.constant 0 : i32
    %c0_i32_0 = arith.constant 0 : i32
    %c0_i32_1 = arith.constant 0 : i32
    return %c0_i32, %c0_i32_0 : i32, i32
  }
  func.func @transform_8(%arg0: i32) -> (i32, i32) {
    %c0_i32 = arith.constant 0 : i32
    %c0_i32_0 = arith.constant 0 : i32
    %c0_i32_1 = arith.constant 0 : i32
    return %c0_i32, %c0_i32_0 : i32, i32
  }
  func.func @transform_9(%arg0: i32) -> (i32, i32) {
    %c0_i32 = arith.constant 0 : i32
    %c0_i32_0 = arith.constant 0 : i32
    %c0_i32_1 = arith.constant 0 : i32
    return %c0_i32, %c0_i32_0 : i32, i32
  }
  func.func @transform_10(%arg0: i32) -> (i32, i32) {
    %c0_i32 = arith.constant 0 : i32
    %c0_i32_0 = arith.constant 0 : i32
    %c0_i32_1 = arith.constant 0 : i32
    return %c0_i32, %c0_i32_0 : i32, i32
  }
}

</mosaic_0001>

<llo_original>
// kernel: tpu_custom_call.1
$region0: #{tpu_custom_call.1}
  #allocation0 [shape = 'u32[]', space=smem, size = 0x4, offset = 0x4, fixed_abs, tag = 'smem constant byte address 0x4 - core index']
  #allocation1 [shape = 'u32[72,128]{1,0:T(1,128)}', space=vmem, size = 0x9000, scoped, tag = 'internal scratch']
  #allocation2 [shape = 'f32[6,192]{1,0:T(8,128)}', space=vmem, size = 0x2000, scoped, tag = 'scratch operand']
  #allocation3 [shape = 'f32[6,32]{1,0:T(8,128)}', space=vmem, size = 0x1000, scoped, tag = 'scratch operand']
  %s0 = inlined_call_operand.vmem [shape: f32[6,33], index: 0, kind: input, shape index: {}]
  %s1 = inlined_call_operand.vmem [shape: f32[33,32], index: 1, kind: input, shape index: {}]
  %s2 = inlined_call_operand.vmem [shape: f32[32,192], index: 2, kind: input, shape index: {}]
  %s3 = inlined_call_operand.vmem [shape: f32[1,192], index: 3, kind: input, shape index: {}]
  %s4 = inlined_call_operand.hbm [shape: f32[64,192], index: 4, kind: input, shape index: {}]
  %s5 = inlined_call_operand.vmem [shape: f32[1,64], index: 5, kind: input, shape index: {}]
  %s6 = inlined_call_operand.hbm [shape: f32[32,32], index: 6, kind: input, shape index: {}]
  %s7 = inlined_call_operand.vmem [shape: f32[1,32], index: 7, kind: input, shape index: {}]
  %s8 = inlined_call_operand.vmem [shape: f32[32,16], index: 8, kind: input, shape index: {}]
  %s9 = inlined_call_operand.vmem [shape: f32[1,16], index: 9, kind: input, shape index: {}]
  %s10 = inlined_call_operand.hbm [shape: f32[1,16], index: 10, kind: output, shape index: {}]
  %s11 = sld [smem:[#allocation0]]
  $region58: #{tpu_custom_call.1} parent=0
    _
  %s13 = ssub.s32 1, %s11
  %s14 = scalar_select 0, %s13, %s11
  $region1: #{tpu_custom_call.1} parent=0
    #allocation4 [shape = 'u8[65536]{0}', space=vmem, size = 0x10000, scoped, tag = 'input window, operand 4, single buffered']
    #allocation5 [shape = 's32[1]{0}', space=sflag, size = 0x4, scoped, tag = 'scoped memory for tpu_custom_call.1']
    #allocation6 [shape = 's32[1]{0}', space=sflag, size = 0x4, scoped, tag = 'scoped memory for tpu_custom_call.1']
    #allocation7 [shape = 'u8[16384]{0}', space=vmem, size = 0x4000, scoped, tag = 'input window, operand 6, single buffered']
    #allocation8 [shape = 's32[1]{0}', space=sflag, size = 0x4, scoped, tag = 'scoped memory for tpu_custom_call.1']
    #allocation9 [shape = 'u8[512]{0}', space=vmem, size = 0x400, scoped, tag = 'output window, operand 0, single buffered']
    %15 = vsyncpa [#allocation5], 0
    %16 = vsyncpa [#allocation8], 0
    %17 = vsyncpa [#allocation6], 0
    // Predicated region
    $region2: #{tpu_custom_call.1} parent=1 // pred_check
      _
    $region3: #{tpu_custom_call.1} parent=1 // pred_check_branch
      %19 = sbr.rel (0) target = $region5
    $region4: #{tpu_custom_call.1} parent=1 // pred_region
      _
    $region5: #{tpu_custom_call.1} parent=1 // pred_fallthru
      _
    // Predicated region
    $region6: #{tpu_custom_call.1} parent=1 // pred_check
      _
    $region7: #{tpu_custom_call.1} parent=1 // pred_check_branch
      %21 = sbr.rel (0) target = $region9
    $region8: #{tpu_custom_call.1} parent=1 // pred_region
      _
    $region9: #{tpu_custom_call.1} parent=1 // pred_fallthru
      _
    // Predicated region
    $region10: #{tpu_custom_call.1} parent=1 // pred_check
      _
    $region11: #{tpu_custom_call.1} parent=1 // pred_check_branch
      %23 = sbr.rel (0) target = $region13
    $region12: #{tpu_custom_call.1} parent=1 // pred_region
      _
    $region13: #{tpu_custom_call.1} parent=1 // pred_fallthru
      _
    // Predicated region
    $region14: #{tpu_custom_call.1} parent=1 // pred_check
      _
    $region15: #{tpu_custom_call.1} parent=1 // pred_check_branch
      %25 = sbr.rel (0) target = $region17
    $region16: #{tpu_custom_call.1} parent=1 // pred_region
      _
    $region17: #{tpu_custom_call.1} parent=1 // pred_fallthru
      _
    // Predicated region
    $region18: #{tpu_custom_call.1} parent=1 // pred_check
      _
    $region19: #{tpu_custom_call.1} parent=1 // pred_check_branch
      %27 = sbr.rel (0) target = $region21
    $region20: #{tpu_custom_call.1} parent=1 // pred_region
      %29 = vsyncadd [#allocation5], 0
      %s30 = sshll.u32 %s4, 4
      %s31 = int_to_ptr.hbm [resolvable:$true] %s30
      %s32 = sshll.u32 [#allocation4], 4
      %s33 = int_to_ptr.vmem [resolvable:$true] %s32
      %38 = dma.hbm_to_vmem [thread:$0]  %s31, 2048, %s33, [#allocation5], 256, 256, 16
    $region21: #{tpu_custom_call.1} parent=1 // pred_fallthru
      _
    // Predicated region
    $region22: #{tpu_custom_call.1} parent=1 // pred_check
      _
    $region23: #{tpu_custom_call.1} parent=1 // pred_check_branch
      %40 = sbr.rel (0) target = $region25
    $region24: #{tpu_custom_call.1} parent=1 // pred_region
      _
    $region25: #{tpu_custom_call.1} parent=1 // pred_fallthru
      _
    // Predicated region
    $region26: #{tpu_custom_call.1} parent=1 // pred_check
      _
    $region27: #{tpu_custom_call.1} parent=1 // pred_check_branch
      %42 = sbr.rel (0) target = $region29
    $region28: #{tpu_custom_call.1} parent=1 // pred_region
      %44 = vsyncadd [#allocation8], 0
      %s45 = sshll.u32 %s6, 4
      %s46 = int_to_ptr.hbm [resolvable:$true] %s45
      %s47 = sshll.u32 [#allocation7], 4
      %s48 = int_to_ptr.vmem [resolvable:$true] %s47
      %53 = dma.hbm_to_vmem [thread:$0]  %s46, 512, %s48, [#allocation8], 128, 128, 8
    $region29: #{tpu_custom_call.1} parent=1 // pred_fallthru
      _
    // Predicated region
    $region30: #{tpu_custom_call.1} parent=1 // pred_check
      _
    $region31: #{tpu_custom_call.1} parent=1 // pred_check_branch
      %55 = sbr.rel (0) target = $region33
    $region32: #{tpu_custom_call.1} parent=1 // pred_region
      _
    $region33: #{tpu_custom_call.1} parent=1 // pred_fallthru
      _
    // Predicated region
    $region34: #{tpu_custom_call.1} parent=1 // pred_check
      _
    $region35: #{tpu_custom_call.1} parent=1 // pred_check_branch
      %57 = sbr.rel (0) target = $region37
    $region36: #{tpu_custom_call.1} parent=1 // pred_region
      _
    $region37: #{tpu_custom_call.1} parent=1 // pred_fallthru
      _
    // Predicated region
    $region38: #{tpu_custom_call.1} parent=1 // pred_check
      _
    $region39: #{tpu_custom_call.1} parent=1 // pred_check_branch
      %59 = sbr.rel (0) target = $region41
    $region40: #{tpu_custom_call.1} parent=1 // pred_region
      _
    $region41: #{tpu_custom_call.1} parent=1 // pred_fallthru
      _
    // Predicated region
    $region42: #{tpu_custom_call.1} parent=1 // pred_check
      _
    $region43: #{tpu_custom_call.1} parent=1 // pred_check_branch
      %61 = sbr.rel (0) target = $region45
    $region44: #{tpu_custom_call.1} parent=1 // pred_region
      %63 = dma.done [#allocation5], 2048
    $region45: #{tpu_custom_call.1} parent=1 // pred_fallthru
      _
    // Predicated region
    $region46: #{tpu_custom_call.1} parent=1 // pred_check
      _
    $region47: #{tpu_custom_call.1} parent=1 // pred_check_branch
      %65 = sbr.rel (0) target = $region49
    $region48: #{tpu_custom_call.1} parent=1 // pred_region
      %67 = dma.done [#allocation8], 512
    $region49: #{tpu_custom_call.1} parent=1 // pred_fallthru
      _
    %v68 = vld [vmem:[%s0] sm:$0x3f]
    %v69 = vld [vmem:[%s1] sm:$0xff]
    %v70 = vld [vmem:[%s1 + $0x8] sm:$0xff]
    %v71 = vld [vmem:[%s1 + $0x10] sm:$0xff]
    %v72 = vld [vmem:[%s1 + $0x18] sm:$0xff]
    %v73 = vld [vmem:[%s1 + $0x20] sm:$0x1]
    %vm74 = vcmask 269312
    %v76 = vsel %vm74, %v68, 0
    %vm78 = vcmask 1040384
    %v80 = vsel %vm78, %v73, 0
    %82 = vmatpush.msra.mxu0 0.0
    %83 = vmatpush.msra.mxu0 0.0
    %84 = vmatpush.msra.mxu0 0.0
    %85 = vmatpush.msra.mxu0 0.0
    %86 = vmatpush.msra.mxu0 0.0
    %87 = vmatpush.msra.mxu0 0.0
    %88 = vmatpush.msra.mxu0 0.0
    %89 = vmatpush.msra.mxu0 0.0
    %90 = vmatpush.msra.mxu0 0.0
    %91 = vmatpush.msra.mxu0 0.0
    %92 = vmatpush.msra.mxu0 0.0
    %93 = vmatpush.msra.mxu0 %v80
    %94 = vmatpush.msra.mxu0 %v72
    %95 = vmatpush.msra.mxu0 %v71
    %96 = vmatpush.msra.mxu0 %v70
    %97 = vmatpush.msra.mxu0 %v69
    %98 = vmatmul.f32.gmra.mxu0 %v76
    %v99 = vpop.f32.mrf.mxu0
    %v100 = vadd.f32 0.0, %v99
    %101 = vdwg.mxu0
    %v102 = vld [vmem:[%s2] sm:$0xff]
    %v103 = vld [vmem:[%s2 + $0x8] sm:$0xff]
    %v104 = vld [vmem:[%s2 + $0x10] sm:$0xff]
    %v105 = vld [vmem:[%s2 + $0x18] sm:$0xff]
    %v106 = vld [vmem:[%s2 + $0x20] sm:$0xff]
    %v107 = vld [vmem:[%s2 + $0x28] sm:$0xff]
    %v108 = vld [vmem:[%s2 + $0x30] sm:$0xff]
    %v109 = vld [vmem:[%s2 + $0x38] sm:$0xff]
    %v110 = vld [vmem:[%s3] sm:$0x3]
    %v112 = vperm.slane %v110, 0
    %v113 = vperm.slane %v110, 1
    %vm116 = vcmask 261120
    %v118 = vsel %vm116, %v100, 0
    %120 = vmatpush.msra.mxu0 0.0
    %121 = vmatpush.msra.mxu0 0.0
    %122 = vmatpush.msra.mxu0 0.0
    %123 = vmatpush.msra.mxu0 0.0
    %124 = vmatpush.msra.mxu0 0.0
    %125 = vmatpush.msra.mxu0 0.0
    %126 = vmatpush.msra.mxu0 0.0
    %127 = vmatpush.msra.mxu0 0.0
    %128 = vmatpush.msra.mxu0 0.0
    %129 = vmatpush.msra.mxu0 0.0
    %130 = vmatpush.msra.mxu0 0.0
    %131 = vmatpush.msra.mxu0 0.0
    %132 = vmatpush.msra.mxu0 %v108
    %133 = vmatpush.msra.mxu0 %v106
    %134 = vmatpush.msra.mxu0 %v104
    %135 = vmatpush.msra.mxu0 %v102
    %136 = vmatmul.f32.gmra.mxu0 %v118
    %v137 = vpop.f32.mrf.mxu0
    %v138 = vadd.f32 %v112, %v137
    %139 = vdwg.mxu0
    %140 = vmatpush.msra.mxu0 0.0
    %141 = vmatpush.msra.mxu0 0.0
    %142 = vmatpush.msra.mxu0 0.0
    %143 = vmatpush.msra.mxu0 0.0
    %144 = vmatpush.msra.mxu0 0.0
    %145 = vmatpush.msra.mxu0 0.0
    %146 = vmatpush.msra.mxu0 0.0
    %147 = vmatpush.msra.mxu0 0.0
    %148 = vmatpush.msra.mxu0 0.0
    %149 = vmatpush.msra.mxu0 0.0
    %150 = vmatpush.msra.mxu0 0.0
    %151 = vmatpush.msra.mxu0 0.0
    %152 = vmatpush.msra.mxu0 %v109
    %153 = vmatpush.msra.mxu0 %v107
    %154 = vmatpush.msra.mxu0 %v105
    %155 = vmatpush.msra.mxu0 %v103
    %156 = vmatmul.f32.gmra.mxu0 %v118
    %v157 = vpop.f32.mrf.mxu0
    %v158 = vadd.f32 %v113, %v157
    %159 = vdwg.mxu0
    %160 = vst [vmem:[#allocation2] sm:$0x3f] %v138
    %vm161 = vcmask 521216
    %162 = vst.msk [vmem:[#allocation2 + $0x8] sm:$0x3f] %vm161, %v158
    %v163 = vld [vmem:[#allocation4] sm:$0xff]
    %v164 = vld [vmem:[#allocation4 + $0x8] sm:$0xff]
    %v165 = vld [vmem:[#allocation4 + $0x10] sm:$0xff]
    %v166 = vld [vmem:[#allocation4 + $0x18] sm:$0xff]
    %v167 = vld [vmem:[#allocation4 + $0x20] sm:$0xff]
    %v168 = vld [vmem:[#allocation4 + $0x28] sm:$0xff]
    %v169 = vld [vmem:[#allocation4 + $0x30] sm:$0xff]
    %v170 = vld [vmem:[#allocation4 + $0x38] sm:$0xff]
    %v171 = vld [vmem:[#allocation4 + $0x40] sm:$0xff]
    %v172 = vld [vmem:[#allocation4 + $0x48] sm:$0xff]
    %v173 = vld [vmem:[#allocation4 + $0x50] sm:$0xff]
    %v174 = vld [vmem:[#allocation4 + $0x58] sm:$0xff]
    %v175 = vld [vmem:[#allocation4 + $0x60] sm:$0xff]
    %v176 = vld [vmem:[#allocation4 + $0x68] sm:$0xff]
    %v177 = vld [vmem:[#allocation4 + $0x70] sm:$0xff]
    %v178 = vld [vmem:[#allocation4 + $0x78] sm:$0xff]
    %v179 = vld [vmem:[%s5] sm:$0x1]
    %v180 = vld [vmem:[#allocation2] ss:$8 sm:$0x3]
    %vm181 = vcmask 523264
    %v183 = vsel %vm181, 0.0, 0
    %185 = vmatpush.msra.mxu0 0.0
    %186 = vmatpush.msra.mxu0 0.0
    %187 = vmatpush.msra.mxu0 0.0
    %188 = vmatpush.msra.mxu0 0.0
    %189 = vmatpush.msra.mxu0 0.0
    %190 = vmatpush.msra.mxu0 0.0
    %191 = vmatpush.msra.mxu0 0.0
    %192 = vmatpush.msra.mxu0 0.0
    %193 = vmatpush.msra.mxu0 %v177
    %194 = vmatpush.msra.mxu0 %v175
    %195 = vmatpush.msra.mxu0 %v173
    %196 = vmatpush.msra.mxu0 %v171
    %197 = vmatpush.msra.mxu0 %v169
    %198 = vmatpush.msra.mxu0 %v167
    %199 = vmatpush.msra.mxu0 %v165
    %200 = vmatpush.msra.mxu0 %v163
    %201 = vmatmul.f32.gmra.mxu0 %v183
    %v202 = vpop.f32.mrf.mxu0
    %v203 = vadd.f32 0.0, %v202
    %204 = vdwg.mxu0
    %205 = vmatpush.msra.mxu0 0.0
    %206 = vmatpush.msra.mxu0 0.0
    %207 = vmatpush.msra.mxu0 0.0
    %208 = vmatpush.msra.mxu0 0.0
    %209 = vmatpush.msra.mxu0 0.0
    %210 = vmatpush.msra.mxu0 0.0
    %211 = vmatpush.msra.mxu0 0.0
    %212 = vmatpush.msra.mxu0 0.0
    %213 = vmatpush.msra.mxu0 %v178
    %214 = vmatpush.msra.mxu0 %v176
    %215 = vmatpush.msra.mxu0 %v174
    %216 = vmatpush.msra.mxu0 %v172
    %217 = vmatpush.msra.mxu0 %v170
    %218 = vmatpush.msra.mxu0 %v168
    %219 = vmatpush.msra.mxu0 %v166
    %220 = vmatpush.msra.mxu0 %v164
    %221 = vmatmul.f32.gmra.mxu0 %v183
    %v222 = vpop.f32.mrf.mxu0
    %v223 = vadd.f32 0.0, %v222
    %224 = vdwg.mxu0
    %v225 = vadd.f32 %v180, %v203
    %v226 = vxor.u32 %v225, 2147483648
    %v227 = vmul.f32 %v226, 1.442695
    %v228 = vpow.pop %v227
    %v229 = vadd.f32 %v228, 1.0
    %v230 = vrcp.pop %v229
    %v231 = vmul.f32 %v229, %v230
    %v232 = vsub.f32 1.0, %v231
    %v233 = vmul.f32 %v230, %v232
    %v234 = vadd.f32 %v230, %v233
    %vm235 = vweird.f32 %v229
    %vm236 = vweird.f32 %v230
    %vm237 = vmor %vm235, %vm236
    %v238 = vsel %vm237, %v230, %v234
    %v239 = vand.u32 2147483647, %v229
    %vm240 = vcmp.eq.f32.partialorder %v239, 8.507059e+37
    %v241 = vand.u32 %v229, 2147483648
    %v242 = vor.u32 1.1754944e-38, %v241
    %v243 = vsel %vm240, %v242, %v238
    %v244 = vmul.f32 1.0, %v243
    %v245 = vadd.f32 %v223, %v179
    %v246 = vmul.f32 %v244, %v245
    %v248 = vrot.slane %v180, 1
    %v250 = vadd.f32 %v248, %v246
    %v251 = vtanh.pop %v250
    %v252 = vsub.f32 1.0, %v244
    %254 = vrot.lane.b32.xlu0 %v251, 64
    %v255 = vpop.permute.xlu0 %254
    %v257 = vmul.f32 %v252, %v255
    %v258 = vmul.f32 %v244, 0.0
    %v259 = vadd.f32 %v257, %v258
    %v261 = vperm.slane %v259, 0
    %262 = vrot.lane.b32.xlu0 %v261, 32
    %v263 = vpop.permute.xlu0 %262
    %vm265 = vcmask 253952
    %266 = vst.msk [vmem:[#allocation3] sm:$0x1] %vm265, %v263
    %s267 = scalar_lea.vmem [#allocation2], 1
    %v268 = vld [vmem:[%s267] ss:$8 sm:$0x3]
    %269 = vrot.lane.b32.xlu0 %v261, 64
    %v270 = vpop.permute.xlu0 %269
    %v271 = vsel %vm181, %v270, 0
    %273 = vmatpush.msra.mxu0 0.0
    %274 = vmatpush.msra.mxu0 0.0
    %275 = vmatpush.msra.mxu0 0.0
    %276 = vmatpush.msra.mxu0 0.0
    %277 = vmatpush.msra.mxu0 0.0
    %278 = vmatpush.msra.mxu0 0.0
    %279 = vmatpush.msra.mxu0 0.0
    %280 = vmatpush.msra.mxu0 0.0
    %281 = vmatpush.msra.mxu0 %v177
    %282 = vmatpush.msra.mxu0 %v175
    %283 = vmatpush.msra.mxu0 %v173
    %284 = vmatpush.msra.mxu0 %v171
    %285 = vmatpush.msra.mxu0 %v169
    %286 = vmatpush.msra.mxu0 %v167
    %287 = vmatpush.msra.mxu0 %v165
    %288 = vmatpush.msra.mxu0 %v163
    %289 = vmatmul.f32.gmra.mxu0 %v271
    %v290 = vpop.f32.mrf.mxu0
    %v291 = vadd.f32 0.0, %v290
    %292 = vdwg.mxu0
    %293 = vmatpush.msra.mxu0 0.0
    %294 = vmatpush.msra.mxu0 0.0
    %295 = vmatpush.msra.mxu0 0.0
    %296 = vmatpush.msra.mxu0 0.0
    %297 = vmatpush.msra.mxu0 0.0
    %298 = vmatpush.msra.mxu0 0.0
    %299 = vmatpush.msra.mxu0 0.0
    %300 = vmatpush.msra.mxu0 0.0
    %301 = vmatpush.msra.mxu0 %v178
    %302 = vmatpush.msra.mxu0 %v176
    %303 = vmatpush.msra.mxu0 %v174
    %304 = vmatpush.msra.mxu0 %v172
    %305 = vmatpush.msra.mxu0 %v170
    %306 = vmatpush.msra.mxu0 %v168
    %307 = vmatpush.msra.mxu0 %v166
    %308 = vmatpush.msra.mxu0 %v164
    %309 = vmatmul.f32.gmra.mxu0 %v271
    %v310 = vpop.f32.mrf.mxu0
    %v311 = vadd.f32 0.0, %v310
    %312 = vdwg.mxu0
    %v313 = vadd.f32 %v268, %v291
    %v314 = vxor.u32 %v313, 2147483648
    %v315 = vmul.f32 %v314, 1.442695
    %v316 = vpow.pop %v315
    %v317 = vadd.f32 %v316, 1.0
    %v318 = vrcp.pop %v317
    %v319 = vmul.f32 %v317, %v318
    %v320 = vsub.f32 1.0, %v319
    %v321 = vmul.f32 %v318, %v320
    %v322 = vadd.f32 %v318, %v321
    %vm323 = vweird.f32 %v317
    %vm324 = vweird.f32 %v318
    %vm325 = vmor %vm323, %vm324
    %v326 = vsel %vm325, %v318, %v322
    %v327 = vand.u32 2147483647, %v317
    %vm328 = vcmp.eq.f32.partialorder %v327, 8.507059e+37
    %v329 = vand.u32 %v317, 2147483648
    %v330 = vor.u32 1.1754944e-38, %v329
    %v331 = vsel %vm328, %v330, %v326
    %v332 = vmul.f32 1.0, %v331
    %v333 = vadd.f32 %v311, %v179
    %v334 = vmul.f32 %v332, %v333
    %v336 = vrot.slane %v268, 1
    %v338 = vadd.f32 %v336, %v334
    %v339 = vtanh.pop %v338
    %v340 = vsub.f32 1.0, %v332
    %342 = vrot.lane.b32.xlu0 %v339, 64
    %v343 = vpop.permute.xlu0 %342
    %v345 = vmul.f32 %v340, %v343
    %v346 = vmul.f32 %v332, %v259
    %v347 = vadd.f32 %v345, %v346
    %v349 = vperm.slane %v347, 0
    %350 = vrot.lane.b32.xlu0 %v349, 32
    %v351 = vpop.permute.xlu0 %350
    %353 = vst.msk [vmem:[#allocation3 + $0x1] sm:$0x1] %vm265, %v351
    %s354 = scalar_lea.vmem [#allocation2], 2
    %v355 = vld [vmem:[%s354] ss:$8 sm:$0x3]
    %356 = vrot.lane.b32.xlu0 %v349, 64
    %v357 = vpop.permute.xlu0 %356
    %v358 = vsel %vm181, %v357, 0
    %360 = vmatpush.msra.mxu0 0.0
    %361 = vmatpush.msra.mxu0 0.0
    %362 = vmatpush.msra.mxu0 0.0
    %363 = vmatpush.msra.mxu0 0.0
    %364 = vmatpush.msra.mxu0 0.0
    %365 = vmatpush.msra.mxu0 0.0
    %366 = vmatpush.msra.mxu0 0.0
    %367 = vmatpush.msra.mxu0 0.0
    %368 = vmatpush.msra.mxu0 %v177
    %369 = vmatpush.msra.mxu0 %v175
    %370 = vmatpush.msra.mxu0 %v173
    %371 = vmatpush.msra.mxu0 %v171
    %372 = vmatpush.msra.mxu0 %v169
    %373 = vmatpush.msra.mxu0 %v167
    %374 = vmatpush.msra.mxu0 %v165
    %375 = vmatpush.msra.mxu0 %v163
    %376 = vmatmul.f32.gmra.mxu0 %v358
    %v377 = vpop.f32.mrf.mxu0
    %v378 = vadd.f32 0.0, %v377
    %379 = vdwg.mxu0
    %380 = vmatpush.msra.mxu0 0.0
    %381 = vmatpush.msra.mxu0 0.0
    %382 = vmatpush.msra.mxu0 0.0
    %383 = vmatpush.msra.mxu0 0.0
    %384 = vmatpush.msra.mxu0 0.0
    %385 = vmatpush.msra.mxu0 0.0
    %386 = vmatpush.msra.mxu0 0.0
    %387 = vmatpush.msra.mxu0 0.0
    %388 = vmatpush.msra.mxu0 %v178
    %389 = vmatpush.msra.mxu0 %v176
    %390 = vmatpush.msra.mxu0 %v174
    %391 = vmatpush.msra.mxu0 %v172
    %392 = vmatpush.msra.mxu0 %v170
    %393 = vmatpush.msra.mxu0 %v168
    %394 = vmatpush.msra.mxu0 %v166
    %395 = vmatpush.msra.mxu0 %v164
    %396 = vmatmul.f32.gmra.mxu0 %v358
    %v397 = vpop.f32.mrf.mxu0
    %v398 = vadd.f32 0.0, %v397
    %399 = vdwg.mxu0
    %v400 = vadd.f32 %v355, %v378
    %v401 = vxor.u32 %v400, 2147483648
    %v402 = vmul.f32 %v401, 1.442695
    %v403 = vpow.pop %v402
    %v404 = vadd.f32 %v403, 1.0
    %v405 = vrcp.pop %v404
    %v406 = vmul.f32 %v404, %v405
    %v407 = vsub.f32 1.0, %v406
    %v408 = vmul.f32 %v405, %v407
    %v409 = vadd.f32 %v405, %v408
    %vm410 = vweird.f32 %v404
    %vm411 = vweird.f32 %v405
    %vm412 = vmor %vm410, %vm411
    %v413 = vsel %vm412, %v405, %v409
    %v414 = vand.u32 2147483647, %v404
    %vm415 = vcmp.eq.f32.partialorder %v414, 8.507059e+37
    %v416 = vand.u32 %v404, 2147483648
    %v417 = vor.u32 1.1754944e-38, %v416
    %v418 = vsel %vm415, %v417, %v413
    %v419 = vmul.f32 1.0, %v418
    %v420 = vadd.f32 %v398, %v179
    %v421 = vmul.f32 %v419, %v420
    %v423 = vrot.slane %v355, 1
    %v425 = vadd.f32 %v423, %v421
    %v426 = vtanh.pop %v425
    %v427 = vsub.f32 1.0, %v419
    %429 = vrot.lane.b32.xlu0 %v426, 64
    %v430 = vpop.permute.xlu0 %429
    %v432 = vmul.f32 %v427, %v430
    %v433 = vmul.f32 %v419, %v347
    %v434 = vadd.f32 %v432, %v433
    %v436 = vperm.slane %v434, 0
    %437 = vrot.lane.b32.xlu0 %v436, 32
    %v438 = vpop.permute.xlu0 %437
    %440 = vst.msk [vmem:[#allocation3 + $0x2] sm:$0x1] %vm265, %v438
    %s441 = scalar_lea.vmem [#allocation2], 3
    %v442 = vld [vmem:[%s441] ss:$8 sm:$0x3]
    %443 = vrot.lane.b32.xlu0 %v436, 64
    %v444 = vpop.permute.xlu0 %443
    %v445 = vsel %vm181, %v444, 0
    %447 = vmatpush.msra.mxu0 0.0
    %448 = vmatpush.msra.mxu0 0.0
    %449 = vmatpush.msra.mxu0 0.0
    %450 = vmatpush.msra.mxu0 0.0
    %451 = vmatpush.msra.mxu0 0.0
    %452 = vmatpush.msra.mxu0 0.0
    %453 = vmatpush.msra.mxu0 0.0
    %454 = vmatpush.msra.mxu0 0.0
    %455 = vmatpush.msra.mxu0 %v177
    %456 = vmatpush.msra.mxu0 %v175
    %457 = vmatpush.msra.mxu0 %v173
    %458 = vmatpush.msra.mxu0 %v171
    %459 = vmatpush.msra.mxu0 %v169
    %460 = vmatpush.msra.mxu0 %v167
    %461 = vmatpush.msra.mxu0 %v165
    %462 = vmatpush.msra.mxu0 %v163
    %463 = vmatmul.f32.gmra.mxu0 %v445
    %v464 = vpop.f32.mrf.mxu0
    %v465 = vadd.f32 0.0, %v464
    %466 = vdwg.mxu0
    %467 = vmatpush.msra.mxu0 0.0
    %468 = vmatpush.msra.mxu0 0.0
    %469 = vmatpush.msra.mxu0 0.0
    %470 = vmatpush.msra.mxu0 0.0
    %471 = vmatpush.msra.mxu0 0.0
    %472 = vmatpush.msra.mxu0 0.0
    %473 = vmatpush.msra.mxu0 0.0
    %474 = vmatpush.msra.mxu0 0.0
    %475 = vmatpush.msra.mxu0 %v178
    %476 = vmatpush.msra.mxu0 %v176
    %477 = vmatpush.msra.mxu0 %v174
    %478 = vmatpush.msra.mxu0 %v172
    %479 = vmatpush.msra.mxu0 %v170
    %480 = vmatpush.msra.mxu0 %v168
    %481 = vmatpush.msra.mxu0 %v166
    %482 = vmatpush.msra.mxu0 %v164
    %483 = vmatmul.f32.gmra.mxu0 %v445
    %v484 = vpop.f32.mrf.mxu0
    %v485 = vadd.f32 0.0, %v484
    %486 = vdwg.mxu0
    %v487 = vadd.f32 %v442, %v465
    %v488 = vxor.u32 %v487, 2147483648
    %v489 = vmul.f32 %v488, 1.442695
    %v490 = vpow.pop %v489
    %v491 = vadd.f32 %v490, 1.0
    %v492 = vrcp.pop %v491
    %v493 = vmul.f32 %v491, %v492
    %v494 = vsub.f32 1.0, %v493
    %v495 = vmul.f32 %v492, %v494
    %v496 = vadd.f32 %v492, %v495
    %vm497 = vweird.f32 %v491
    %vm498 = vweird.f32 %v492
    %vm499 = vmor %vm497, %vm498
    %v500 = vsel %vm499, %v492, %v496
    %v501 = vand.u32 2147483647, %v491
    %vm502 = vcmp.eq.f32.partialorder %v501, 8.507059e+37
    %v503 = vand.u32 %v491, 2147483648
    %v504 = vor.u32 1.1754944e-38, %v503
    %v505 = vsel %vm502, %v504, %v500
    %v506 = vmul.f32 1.0, %v505
    %v507 = vadd.f32 %v485, %v179
    %v508 = vmul.f32 %v506, %v507
    %v510 = vrot.slane %v442, 1
    %v512 = vadd.f32 %v510, %v508
    %v513 = vtanh.pop %v512
    %v514 = vsub.f32 1.0, %v506
    %516 = vrot.lane.b32.xlu0 %v513, 64
    %v517 = vpop.permute.xlu0 %516
    %v519 = vmul.f32 %v514, %v517
    %v520 = vmul.f32 %v506, %v434
    %v521 = vadd.f32 %v519, %v520
    %v523 = vperm.slane %v521, 0
    %524 = vrot.lane.b32.xlu0 %v523, 32
    %v525 = vpop.permute.xlu0 %524
    %527 = vst.msk [vmem:[#allocation3 + $0x3] sm:$0x1] %vm265, %v525
    %s528 = scalar_lea.vmem [#allocation2], 4
    %v529 = vld [vmem:[%s528] ss:$8 sm:$0x3]
    %530 = vrot.lane.b32.xlu0 %v523, 64
    %v531 = vpop.permute.xlu0 %530
    %v532 = vsel %vm181, %v531, 0
    %534 = vmatpush.msra.mxu0 0.0
    %535 = vmatpush.msra.mxu0 0.0
    %536 = vmatpush.msra.mxu0 0.0
    %537 = vmatpush.msra.mxu0 0.0
    %538 = vmatpush.msra.mxu0 0.0
    %539 = vmatpush.msra.mxu0 0.0
    %540 = vmatpush.msra.mxu0 0.0
    %541 = vmatpush.msra.mxu0 0.0
    %542 = vmatpush.msra.mxu0 %v177
    %543 = vmatpush.msra.mxu0 %v175
    %544 = vmatpush.msra.mxu0 %v173
    %545 = vmatpush.msra.mxu0 %v171
    %546 = vmatpush.msra.mxu0 %v169
    %547 = vmatpush.msra.mxu0 %v167
    %548 = vmatpush.msra.mxu0 %v165
    %549 = vmatpush.msra.mxu0 %v163
    %550 = vmatmul.f32.gmra.mxu0 %v532
    %v551 = vpop.f32.mrf.mxu0
    %v552 = vadd.f32 0.0, %v551
    %553 = vdwg.mxu0
    %554 = vmatpush.msra.mxu0 0.0
    %555 = vmatpush.msra.mxu0 0.0
    %556 = vmatpush.msra.mxu0 0.0
    %557 = vmatpush.msra.mxu0 0.0
    %558 = vmatpush.msra.mxu0 0.0
    %559 = vmatpush.msra.mxu0 0.0
    %560 = vmatpush.msra.mxu0 0.0
    %561 = vmatpush.msra.mxu0 0.0
    %562 = vmatpush.msra.mxu0 %v178
    %563 = vmatpush.msra.mxu0 %v176
    %564 = vmatpush.msra.mxu0 %v174
    %565 = vmatpush.msra.mxu0 %v172
    %566 = vmatpush.msra.mxu0 %v170
    %567 = vmatpush.msra.mxu0 %v168
    %568 = vmatpush.msra.mxu0 %v166
    %569 = vmatpush.msra.mxu0 %v164
    %570 = vmatmul.f32.gmra.mxu0 %v532
    %v571 = vpop.f32.mrf.mxu0
    %v572 = vadd.f32 0.0, %v571
    %573 = vdwg.mxu0
    %v574 = vadd.f32 %v529, %v552
    %v575 = vxor.u32 %v574, 2147483648
    %v576 = vmul.f32 %v575, 1.442695
    %v577 = vpow.pop %v576
    %v578 = vadd.f32 %v577, 1.0
    %v579 = vrcp.pop %v578
    %v580 = vmul.f32 %v578, %v579
    %v581 = vsub.f32 1.0, %v580
    %v582 = vmul.f32 %v579, %v581
    %v583 = vadd.f32 %v579, %v582
    %vm584 = vweird.f32 %v578
    %vm585 = vweird.f32 %v579
    %vm586 = vmor %vm584, %vm585
    %v587 = vsel %vm586, %v579, %v583
    %v588 = vand.u32 2147483647, %v578
    %vm589 = vcmp.eq.f32.partialorder %v588, 8.507059e+37
    %v590 = vand.u32 %v578, 2147483648
    %v591 = vor.u32 1.1754944e-38, %v590
    %v592 = vsel %vm589, %v591, %v587
    %v593 = vmul.f32 1.0, %v592
    %v594 = vadd.f32 %v572, %v179
    %v595 = vmul.f32 %v593, %v594
    %v597 = vrot.slane %v529, 1
    %v599 = vadd.f32 %v597, %v595
    %v600 = vtanh.pop %v599
    %v601 = vsub.f32 1.0, %v593
    %603 = vrot.lane.b32.xlu0 %v600, 64
    %v604 = vpop.permute.xlu0 %603
    %v606 = vmul.f32 %v601, %v604
    %v607 = vmul.f32 %v593, %v521
    %v608 = vadd.f32 %v606, %v607
    %v610 = vperm.slane %v608, 0
    %611 = vrot.lane.b32.xlu0 %v610, 32
    %v612 = vpop.permute.xlu0 %611
    %614 = vst.msk [vmem:[#allocation3 + $0x4] sm:$0x1] %vm265, %v612
    %s615 = scalar_lea.vmem [#allocation2], 5
    %v616 = vld [vmem:[%s615] ss:$8 sm:$0x3]
    %617 = vrot.lane.b32.xlu0 %v610, 64
    %v618 = vpop.permute.xlu0 %617
    %v619 = vsel %vm181, %v618, 0
    %621 = vmatpush.msra.mxu0 0.0
    %622 = vmatpush.msra.mxu0 0.0
    %623 = vmatpush.msra.mxu0 0.0
    %624 = vmatpush.msra.mxu0 0.0
    %625 = vmatpush.msra.mxu0 0.0
    %626 = vmatpush.msra.mxu0 0.0
    %627 = vmatpush.msra.mxu0 0.0
    %628 = vmatpush.msra.mxu0 0.0
    %629 = vmatpush.msra.mxu0 %v177
    %630 = vmatpush.msra.mxu0 %v175
    %631 = vmatpush.msra.mxu0 %v173
    %632 = vmatpush.msra.mxu0 %v171
    %633 = vmatpush.msra.mxu0 %v169
    %634 = vmatpush.msra.mxu0 %v167
    %635 = vmatpush.msra.mxu0 %v165
    %636 = vmatpush.msra.mxu0 %v163
    %637 = vmatmul.f32.gmra.mxu0 %v619
    %v638 = vpop.f32.mrf.mxu0
    %v639 = vadd.f32 0.0, %v638
    %640 = vdwg.mxu0
    %641 = vmatpush.msra.mxu0 0.0
    %642 = vmatpush.msra.mxu0 0.0
    %643 = vmatpush.msra.mxu0 0.0
    %644 = vmatpush.msra.mxu0 0.0
    %645 = vmatpush.msra.mxu0 0.0
    %646 = vmatpush.msra.mxu0 0.0
    %647 = vmatpush.msra.mxu0 0.0
    %648 = vmatpush.msra.mxu0 0.0
    %649 = vmatpush.msra.mxu0 %v178
    %650 = vmatpush.msra.mxu0 %v176
    %651 = vmatpush.msra.mxu0 %v174
    %652 = vmatpush.msra.mxu0 %v172
    %653 = vmatpush.msra.mxu0 %v170
    %654 = vmatpush.msra.mxu0 %v168
    %655 = vmatpush.msra.mxu0 %v166
    %656 = vmatpush.msra.mxu0 %v164
    %657 = vmatmul.f32.gmra.mxu0 %v619
    %v658 = vpop.f32.mrf.mxu0
    %v659 = vadd.f32 0.0, %v658
    %660 = vdwg.mxu0
    %v661 = vadd.f32 %v616, %v639
    %v662 = vxor.u32 %v661, 2147483648
    %v663 = vmul.f32 %v662, 1.442695
    %v664 = vpow.pop %v663
    %v665 = vadd.f32 %v664, 1.0
    %v666 = vrcp.pop %v665
    %v667 = vmul.f32 %v665, %v666
    %v668 = vsub.f32 1.0, %v667
    %v669 = vmul.f32 %v666, %v668
    %v670 = vadd.f32 %v666, %v669
    %vm671 = vweird.f32 %v665
    %vm672 = vweird.f32 %v666
    %vm673 = vmor %vm671, %vm672
    %v674 = vsel %vm673, %v666, %v670
    %v675 = vand.u32 2147483647, %v665
    %vm676 = vcmp.eq.f32.partialorder %v675, 8.507059e+37
    %v677 = vand.u32 %v665, 2147483648
    %v678 = vor.u32 1.1754944e-38, %v677
    %v679 = vsel %vm676, %v678, %v674
    %v680 = vmul.f32 1.0, %v679
    %v681 = vadd.f32 %v659, %v179
    %v682 = vmul.f32 %v680, %v681
    %v684 = vrot.slane %v616, 1
    %v686 = vadd.f32 %v684, %v682
    %v687 = vtanh.pop %v686
    %v688 = vsub.f32 1.0, %v680
    %690 = vrot.lane.b32.xlu0 %v687, 64
    %v691 = vpop.permute.xlu0 %690
    %v693 = vmul.f32 %v688, %v691
    %v694 = vmul.f32 %v680, %v608
    %v695 = vadd.f32 %v693, %v694
    %v697 = vperm.slane %v695, 0
    %698 = vrot.lane.b32.xlu0 %v697, 32
    %v699 = vpop.permute.xlu0 %698
    %701 = vst.msk [vmem:[#allocation3 + $0x5] sm:$0x1] %vm265, %v699
    %v702 = vld [vmem:[#allocation3] sm:$0x3f]
    %v703 = vld [vmem:[#allocation7] sm:$0xff]
    %v704 = vld [vmem:[#allocation7 + $0x8] sm:$0xff]
    %v705 = vld [vmem:[#allocation7 + $0x10] sm:$0xff]
    %v706 = vld [vmem:[#allocation7 + $0x18] sm:$0xff]
    %v707 = vld [vmem:[%s7] sm:$0x1]
    %v709 = vperm.slane %v707, 0
    %v712 = vsel %vm116, %v702, 0
    %714 = vmatpush.msra.mxu0 0.0
    %715 = vmatpush.msra.mxu0 0.0
    %716 = vmatpush.msra.mxu0 0.0
    %717 = vmatpush.msra.mxu0 0.0
    %718 = vmatpush.msra.mxu0 0.0
    %719 = vmatpush.msra.mxu0 0.0
    %720 = vmatpush.msra.mxu0 0.0
    %721 = vmatpush.msra.mxu0 0.0
    %722 = vmatpush.msra.mxu0 0.0
    %723 = vmatpush.msra.mxu0 0.0
    %724 = vmatpush.msra.mxu0 0.0
    %725 = vmatpush.msra.mxu0 0.0
    %726 = vmatpush.msra.mxu0 %v706
    %727 = vmatpush.msra.mxu0 %v705
    %728 = vmatpush.msra.mxu0 %v704
    %729 = vmatpush.msra.mxu0 %v703
    %730 = vmatmul.f32.gmra.mxu0 %v712
    %v731 = vpop.f32.mrf.mxu0
    %v732 = vadd.f32 %v709, %v731
    %733 = vdwg.mxu0
    %v734 = vtanh.pop %v732
    %v735 = vmul.f32 %v734, %v100
    %vm736 = vcmask 259072
    %v737 = vsel %vm736, %v735, 0.0
    %v738 = vrot.slane %v737, 4
    %v739 = vadd.f32 %v737, %v738
    %v740 = vrot.slane %v739, 2
    %v741 = vadd.f32 %v739, %v740
    %v742 = vrot.slane %v741, 1
    %v743 = vadd.f32 %v741, %v742
    %v744 = vld [vmem:[%s8] sm:$0xff]
    %v745 = vld [vmem:[%s8 + $0x8] sm:$0xff]
    %v746 = vld [vmem:[%s8 + $0x10] sm:$0xff]
    %v747 = vld [vmem:[%s8 + $0x18] sm:$0xff]
    %v748 = vld [vmem:[%s9] sm:$0x1]
    %v750 = vsel %vm116, %v743, 0
    %752 = vmatpush.msra.mxu0 0.0
    %753 = vmatpush.msra.mxu0 0.0
    %754 = vmatpush.msra.mxu0 0.0
    %755 = vmatpush.msra.mxu0 0.0
    %756 = vmatpush.msra.mxu0 0.0
    %757 = vmatpush.msra.mxu0 0.0
    %758 = vmatpush.msra.mxu0 0.0
    %759 = vmatpush.msra.mxu0 0.0
    %760 = vmatpush.msra.mxu0 0.0
    %761 = vmatpush.msra.mxu0 0.0
    %762 = vmatpush.msra.mxu0 0.0
    %763 = vmatpush.msra.mxu0 0.0
    %764 = vmatpush.msra.mxu0 %v747
    %765 = vmatpush.msra.mxu0 %v746
    %766 = vmatpush.msra.mxu0 %v745
    %767 = vmatpush.msra.mxu0 %v744
    %768 = vmatmul.f32.gmra.mxu0 %v750
    %v769 = vpop.f32.mrf.mxu0
    %v770 = vadd.f32 %v748, %v769
    %771 = vdwg.mxu0
    %vm772 = vcmask 122880
    %773 = vst.msk [vmem:[#allocation9] sm:$0x1] %vm772, %v770
    // Predicated region
    $region50: #{tpu_custom_call.1} parent=1 // pred_check
      _
    $region51: #{tpu_custom_call.1} parent=1 // pred_check_branch
      %775 = sbr.rel (0) target = $region53
    $region52: #{tpu_custom_call.1} parent=1 // pred_region
      %777 = vsyncadd [#allocation6], 0
      %s779 = sshll.u32 [#allocation9], 4
      %s780 = int_to_ptr.vmem [resolvable:$true] %s779
      %s781 = sshll.u32 %s10, 4
      %s782 = int_to_ptr.hbm [resolvable:$true] %s781
      %784 = dma.vmem_to_hbm [thread:$0]  %s780, 16, %s782, [#allocation6]
    $region53: #{tpu_custom_call.1} parent=1 // pred_fallthru
      _
    // Predicated region
    $region54: #{tpu_custom_call.1} parent=1 // pred_check
      _
    $region55: #{tpu_custom_call.1} parent=1 // pred_check_branch
      %786 = sbr.rel (0) target = $region57
    $region56: #{tpu_custom_call.1} parent=1 // pred_region
      %788 = dma.done [#allocation6], 16
    $region57: #{tpu_custom_call.1} parent=1 // pred_fallthru
      _
    %789 = vsyncpa [#allocation5], 1
    %790 = vsyncpa [#allocation8], 1
    %791 = vsyncpa [#allocation6], 1

</llo_original>
